<compile_context>
chip_gen: v7x
topology: tpu7x:2x2x1
jax: 0.10.0
libtpu: 0.0.40
codegen_flags: <defaults>
</compile_context>

<pallas_src>
import functools

import jax
import jax.numpy as jnp
from jax import lax
from jax.experimental import pallas as pl
from jax.experimental.pallas import tpu as pltpu

_LANE = 128
_SUBLANE = 16  # valid row multiple for both f32 (8) and bf16 (16) tiles


# ----------------------------- Pallas kernels ------------------------------ #

def _mm_bias_act_kernel(x_ref, w_ref, b_ref, o_ref, *, relu):
    # (tm, K) @ (K, Np) on the MXU, f32 accumulate, + bias (+ ReLU) on the VPU.
    acc = jnp.dot(x_ref[...], w_ref[...], preferred_element_type=jnp.float32)
    y = acc + b_ref[...]
    if relu:
        y = jnp.maximum(y, 0.0)
    o_ref[...] = y.astype(o_ref.dtype)


def _mm2_bias_relu_kernel(x_ref, w_ref, xs_ref, ws_ref, b_ref, o_ref):
    # conv2+BN2 (dot 1) fused with shortcut conv1x1+BN / identity (dot 2),
    # residual add, combined bias, final ReLU.
    acc = jnp.dot(x_ref[...], w_ref[...], preferred_element_type=jnp.float32)
    acc = acc + jnp.dot(xs_ref[...], ws_ref[...],
                        preferred_element_type=jnp.float32)
    o_ref[...] = jnp.maximum(acc + b_ref[...], 0.0).astype(o_ref.dtype)


# --------------------------- pallas_call wrappers --------------------------- #

def _round_up(x, m):
    return (x + m - 1) // m * m


def _pick_tm(m, target=512):
    return min(target, _round_up(m, _SUBLANE))


def _compiler_params(vmem_estimate_bytes):
    limit = int(min(max(int(1.5 * vmem_estimate_bytes), 32 * 2**20), 56 * 2**20))
    return pltpu.CompilerParams(dimension_semantics=("parallel",),
                                vmem_limit_bytes=limit)


def matmul_bias_act(x, w, b, *, relu, tm):
    """x:(Mp,K) @ w:(K,Np) + b:(1,Np) (+ReLU). Np % 128 == 0, Mp % tm == 0."""
    Mp, K = x.shape
    Kw, Np = w.shape
    assert K == Kw and Mp % tm == 0 and Np % _LANE == 0
    ib = x.dtype.itemsize
    vmem_est = 2 * (tm * K * ib + tm * Np * 4) + 2 * (K * Np * ib + Np * 4)
    flops = 2 * Mp * K * Np
    bytes_accessed = (Mp * K + K * Np) * ib + Np * 4 + Mp * Np * 4
    kern = functools.partial(_mm_bias_act_kernel, relu=relu)
    return pl.pallas_call(
        kern,
        out_shape=jax.ShapeDtypeStruct((Mp, Np), jnp.float32),
        grid_spec=pltpu.PrefetchScalarGridSpec(
            num_scalar_prefetch=0,
            grid=(Mp // tm,),
            in_specs=[
                pl.BlockSpec((tm, K), lambda i: (i, 0)),
                pl.BlockSpec((K, Np), lambda i: (0, 0)),   # pinned weights
                pl.BlockSpec((1, Np), lambda i: (0, 0)),   # pinned bias
            ],
            out_specs=pl.BlockSpec((tm, Np), lambda i: (i, 0)),
        ),
        compiler_params=_compiler_params(vmem_est),
        cost_estimate=pl.CostEstimate(flops=flops, transcendentals=0,
                                      bytes_accessed=bytes_accessed),
    )(x, w, b)


def matmul2_bias_relu(x, w, xs, ws, b, *, tm):
    """relu(x @ w + xs @ ws + b): conv2 + BN2 + shortcut + add + ReLU, fused."""
    Mp, K = x.shape
    Kw, Np = w.shape
    Mp2, Ks = xs.shape
    Ksw, Np2 = ws.shape
    assert K == Kw and Ks == Ksw and Mp == Mp2 and Np == Np2
    assert Mp % tm == 0 and Np % _LANE == 0
    ib = x.dtype.itemsize
    vmem_est = (2 * (tm * K * ib + tm * Ks * ib + tm * Np * 4)
                + 2 * ((K + Ks) * Np * ib + Np * 4))
    flops = 2 * Mp * (K + Ks) * Np
    bytes_accessed = (Mp * (K + Ks) + (K + Ks) * Np) * ib + Np * 4 + Mp * Np * 4
    return pl.pallas_call(
        _mm2_bias_relu_kernel,
        out_shape=jax.ShapeDtypeStruct((Mp, Np), jnp.float32),
        grid_spec=pltpu.PrefetchScalarGridSpec(
            num_scalar_prefetch=0,
            grid=(Mp // tm,),
            in_specs=[
                pl.BlockSpec((tm, K), lambda i: (i, 0)),
                pl.BlockSpec((K, Np), lambda i: (0, 0)),   # pinned
                pl.BlockSpec((tm, Ks), lambda i: (i, 0)),
                pl.BlockSpec((Ks, Np), lambda i: (0, 0)),  # pinned
                pl.BlockSpec((1, Np), lambda i: (0, 0)),   # pinned
            ],
            out_specs=pl.BlockSpec((tm, Np), lambda i: (i, 0)),
        ),
        compiler_params=_compiler_params(vmem_est),
        cost_estimate=pl.CostEstimate(flops=flops, transcendentals=0,
                                      bytes_accessed=bytes_accessed),
    )(x, w, xs, ws, b)


# ------------------------------ JAX glue ----------------------------------- #

def im2col_3x3(x_nhwc, stride):
    """3x3 patches with padding=1. Returns (N*Ho*Wo, 9*C) and (N, Ho, Wo)."""
    N, H, W, C = x_nhwc.shape
    xp = jnp.pad(x_nhwc, ((0, 0), (1, 1), (1, 1), (0, 0)))
    Ho = (H - 1) // stride + 1
    Wo = (W - 1) // stride + 1
    cols = []
    for kh in range(3):
        for kw in range(3):
            cols.append(xp[:, kh:kh + (Ho - 1) * stride + 1:stride,
                            kw:kw + (Wo - 1) * stride + 1:stride, :])
    p = jnp.stack(cols, axis=3)  # (N, Ho, Wo, 9, C), taps ordered (kh, kw)
    return p.reshape(N * Ho * Wo, 9 * C), (N, Ho, Wo)


def fold_bn(gamma, beta, mean, var, eps=1e-5):
    scale = gamma / jnp.sqrt(var + eps)
    bias = beta - mean * scale
    return scale, bias  # per-channel vectors


def _pad_rows(a, rows):
    return a if a.shape[0] == rows else jnp.pad(a, ((0, rows - a.shape[0]), (0, 0)))


def _pad_cols(a, cols):
    return a if a.shape[1] == cols else jnp.pad(a, ((0, 0), (0, cols - a.shape[1])))


def residual_block_forward(x_nchw, params, stride, *,
                           compute_dtype=jnp.bfloat16, tm_target=512):
    x = jnp.transpose(x_nchw, (0, 2, 3, 1)).astype(jnp.float32)  # NHWC
    N, H, W, Cin = x.shape
    Cout = params["w1"].shape[0]
    Np = _round_up(Cout, _LANE)          # lane-dense (padded) output channels

    s1, b1 = fold_bn(*params["bn1"])
    s2, b2 = fold_bn(*params["bn2"])

    # --- conv1 (3x3, stride) + BN1 + ReLU ------------------------------------
    x_c = x.astype(compute_dtype)
    p1, (n, Ho, Wo) = im2col_3x3(x_c, stride)
    M = n * Ho * Wo
    tm = _pick_tm(M, tm_target)
    Mp = _round_up(M, tm)

    w1 = jnp.transpose(params["w1"], (2, 3, 1, 0)).reshape(9 * Cin, Cout)
    w1 = w1 * s1[None, :]                               # fold BN1 scale
    w1p = _pad_cols(w1, Np).astype(compute_dtype)
    b1p = _pad_cols(b1.reshape(1, Cout), Np).astype(jnp.float32)
    p1p = _pad_rows(p1, Mp)

    y1 = matmul_bias_act(p1p, w1p, b1p, relu=True, tm=tm)    # (Mp, Np) f32
    y1 = y1[:M, :Cout].astype(compute_dtype).reshape(n, Ho, Wo, Cout)

    # --- shortcut inputs (fused into the final kernel) -----------------------
    if stride != 1 or Cin != Cout:
        xs = x_c[:, ::stride, ::stride, :].reshape(M, Cin)
        ws = jnp.transpose(params["ws"], (2, 3, 1, 0)).reshape(Cin, Cout)
        ss, bs = fold_bn(*params["bns"])
        ws = ws * ss[None, :]                           # fold BNs scale
        b_sc = bs.reshape(1, Cout)
    else:
        xs = x_c.reshape(M, Cout)
        ws = jnp.eye(Cout, dtype=jnp.float32)           # identity shortcut
        b_sc = jnp.zeros((1, Cout), jnp.float32)

    # --- conv2 (3x3, stride 1) + BN2 + shortcut + add + ReLU, one kernel -----
    p2, _ = im2col_3x3(y1, 1)
    w2 = jnp.transpose(params["w2"], (2, 3, 1, 0)).reshape(9 * Cout, Cout)
    w2 = w2 * s2[None, :]                               # fold BN2 scale

    p2p = _pad_rows(p2, Mp)
    xsp = _pad_rows(xs, Mp)
    w2p = _pad_cols(w2, Np).astype(compute_dtype)
    wsp = _pad_cols(ws, Np).astype(compute_dtype)
    bp = _pad_cols(b2.reshape(1, Cout) + b_sc, Np).astype(jnp.float32)

    out = matmul2_bias_relu(p2p, w2p, xsp, wsp, bp, tm=tm)   # (Mp, Np) f32
    out = out[:M, :Cout].reshape(n, Ho, Wo, Cout)
    return jnp.transpose(out, (0, 3, 1, 2))             # back to NCHW


# --------------------------- pure-JAX reference ----------------------------- #

def reference_forward(x_nchw, params, stride, eps=1e-5):
    def conv(x, w, s, pad):
        return lax.conv_general_dilated(
            x, w, (s, s), [(pad, pad), (pad, pad)],
            dimension_numbers=("NCHW", "OIHW", "NCHW"))

    def bn(x, p):
        gamma, beta, mean, var = (a.reshape(1, -1, 1, 1) for a in p)
        return gamma * (x - mean) / jnp.sqrt(var + eps) + beta

    left = conv(x_nchw, params["w1"], stride, 1)
    left = jax.nn.relu(bn(left, params["bn1"]))
    left = bn(conv(left, params["w2"], 1, 1), params["bn2"])
    Cin, Cout = x_nchw.shape[1], params["w1"].shape[0]
    if stride != 1 or Cin != Cout:
        sc = bn(conv(x_nchw, params["ws"], stride, 0), params["bns"])
    else:
        sc = x_nchw
    return jax.nn.relu(left + sc)


# ------------------------------- parameters --------------------------------- #

def init_params(key, inchannel, outchannel):
    ks = jax.random.split(key, 6)

    def bn_params(k):
        k0, k1, k2, k3 = jax.random.split(k, 4)
        gamma = jax.random.uniform(k0, (outchannel,), jnp.float32, 0.5, 1.5)
        beta = 0.1 * jax.random.normal(k1, (outchannel,), jnp.float32)
        mean = 0.1 * jax.random.normal(k2, (outchannel,), jnp.float32)
        var = jax.random.uniform(k3, (outchannel,), jnp.float32, 0.5, 1.5)
        return (gamma, beta, mean, var)

    return {
        "w1": 0.1 * jax.random.normal(ks[0], (outchannel, inchannel, 3, 3), jnp.float32),
        "bn1": bn_params(ks[1]),
        "w2": 0.1 * jax.random.normal(ks[2], (outchannel, outchannel, 3, 3), jnp.float32),
        "bn2": bn_params(ks[3]),
        "ws": 0.1 * jax.random.normal(ks[4], (outchannel, inchannel, 1, 1), jnp.float32),
        "bns": bn_params(ks[5]),
    }


# --------------------------------- main -------------------------------------- #

if __name__ == "__main__":
    key = jax.random.PRNGKey(0)
    k_x, k_p, k_x2, k_p2 = jax.random.split(key, 4)

    # Case 1: projection shortcut (stride=2, Cin != Cout), like the PyTorch spec.
    N, Cin, H, W = 2, 4, 16, 16
    Cout, stride = 8, 2
    x = jax.random.normal(k_x, (N, Cin, H, W), jnp.float32)   # NCHW, like PyTorch
    params = init_params(k_p, Cin, Cout)

    ref = jax.block_until_ready(reference_forward(x, params, stride))

    out_f32 = jax.block_until_ready(
        residual_block_forward(x, params, stride, compute_dtype=jnp.float32))
    assert out_f32.shape == ref.shape == (N, Cout, H // stride, W // stride)
    assert jnp.allclose(out_f32, ref, atol=1e-4, rtol=1e-4), (
        float(jnp.max(jnp.abs(out_f32 - ref))))

    # bf16 MXU path (v6e/v7x fast path); f32 accumulation/epilogue.
    out_bf16 = jax.block_until_ready(
        residual_block_forward(x, params, stride, compute_dtype=jnp.bfloat16))
    assert jnp.allclose(out_bf16, ref, atol=5e-2, rtol=5e-2), (
        float(jnp.max(jnp.abs(out_bf16 - ref))))

    # Case 2: identity shortcut (stride=1, Cin == Cout).
    x2 = jax.random.normal(k_x2, (2, 8, 16, 16), jnp.float32)
    params2 = init_params(k_p2, 8, 8)
    ref2 = jax.block_until_ready(reference_forward(x2, params2, 1))
    out2 = jax.block_until_ready(
        residual_block_forward(x2, params2, 1, compute_dtype=jnp.float32))
    assert out2.shape == ref2.shape == (2, 8, 16, 16)
    assert jnp.allclose(out2, ref2, atol=1e-4, rtol=1e-4), (
        float(jnp.max(jnp.abs(out2 - ref2))))

    print("KERNEL_OK")
</pallas_src>

<mosaic_0001>
module attributes {stable_mosaic.version = 11 : i64} {
  func.func @_mm_bias_act_kernel(%arg0: i32, %arg1: memref<128x36xf32, #tpu.memory_space<vmem>>, %arg2: memref<36x128xf32, #tpu.memory_space<vmem>>, %arg3: memref<1x128xf32, #tpu.memory_space<vmem>>, %arg4: memref<128x128xf32, #tpu.memory_space<vmem>>) attributes {dimension_semantics = [#tpu.dimension_semantics<parallel>], iteration_bounds = array<i64: 1>, scalar_prefetch = 0 : i64, scratch_operands = 0 : i64, tpu.core_type = #tpu.core_type<tc>, window_params = [{transform_indices = @transform_0, window_bounds = array<i64: 128, 36>}, {pipeline_mode = #tpu.pipeline_mode<synchronous>, transform_indices = @transform_1, window_bounds = array<i64: 36, 128>}, {pipeline_mode = #tpu.pipeline_mode<synchronous>, transform_indices = @transform_2, window_bounds = array<i64: 1, 128>}, {transform_indices = @transform_3, window_bounds = array<i64: 128, 128>}]} {
    %c0 = arith.constant 0 : index
    %c0_0 = arith.constant 0 : index
    %0 = vector.load %arg1[%c0, %c0_0] : memref<128x36xf32, #tpu.memory_space<vmem>>, vector<128x36xf32>
    %c0_1 = arith.constant 0 : index
    %c0_2 = arith.constant 0 : index
    %1 = vector.load %arg2[%c0_1, %c0_2] : memref<36x128xf32, #tpu.memory_space<vmem>>, vector<36x128xf32>
    %cst = arith.constant dense<0.000000e+00> : vector<128x128xf32>
    %2 = tpu.matmul %0, %1, %cst {dimension_numbers = #tpu.dot_dimension_numbers<[1], [0], [0], [1], [0, 0, 1, 1], [], []>} : vector<128x36xf32>, vector<36x128xf32>, vector<128x128xf32> -> vector<128x128xf32>
    %c0_3 = arith.constant 0 : index
    %c0_4 = arith.constant 0 : index
    %3 = vector.load %arg3[%c0_3, %c0_4] : memref<1x128xf32, #tpu.memory_space<vmem>>, vector<1x128xf32>
    %4 = vector.broadcast %3 : vector<1x128xf32> to vector<128x128xf32>
    %5 = arith.addf %2, %4 : vector<128x128xf32>
    %cst_5 = arith.constant 0.000000e+00 : f32
    %6 = vector.broadcast %cst_5 : f32 to vector<128x128xf32>
    %7 = arith.maximumf %5, %6 : vector<128x128xf32>
    %c0_6 = arith.constant 0 : index
    %c0_7 = arith.constant 0 : index
    %8 = vector.load %arg4[%c0_6, %c0_7] : memref<128x128xf32, #tpu.memory_space<vmem>>, vector<128x128xf32>
    tpu.vector_store %arg4[%c0_6, %c0_7], %7 {strides = array<i32>} : memref<128x128xf32, #tpu.memory_space<vmem>>, vector<128x128xf32>,
    return
  }
  func.func @transform_0(%arg0: i32) -> (i32, i32) {
    %c0_i32 = arith.constant 0 : i32
    %c0_i32_0 = arith.constant 0 : i32
    return %arg0, %c0_i32 : i32, i32
  }
  func.func @transform_1(%arg0: i32) -> (i32, i32) {
    %c0_i32 = arith.constant 0 : i32
    %c0_i32_0 = arith.constant 0 : i32
    %c0_i32_1 = arith.constant 0 : i32
    return %c0_i32, %c0_i32_0 : i32, i32
  }
  func.func @transform_2(%arg0: i32) -> (i32, i32) {
    %c0_i32 = arith.constant 0 : i32
    %c0_i32_0 = arith.constant 0 : i32
    %c0_i32_1 = arith.constant 0 : i32
    return %c0_i32, %c0_i32_0 : i32, i32
  }
  func.func @transform_3(%arg0: i32) -> (i32, i32) {
    %c0_i32 = arith.constant 0 : i32
    %c0_i32_0 = arith.constant 0 : i32
    return %arg0, %c0_i32 : i32, i32
  }
}

</mosaic_0001>

<llo_original>
// kernel: tpu_custom_call.1
$region0: #{tpu_custom_call.1}
  #allocation0 [shape = 'u32[]', space=smem, size = 0x4, offset = 0x4, fixed_abs, tag = 'smem constant byte address 0x4 - core index']
  #allocation1 [shape = 'u32[144,128]{1,0:T(1,128)}', space=vmem, size = 0x12000, scoped, tag = 'internal scratch']
  %s0 = inlined_call_operand.vmem [shape: f32[128,36], index: 0, kind: input, shape index: {}]
  %s1 = inlined_call_operand.vmem [shape: f32[36,128], index: 1, kind: input, shape index: {}]
  %s2 = inlined_call_operand.vmem [shape: f32[1,128], index: 2, kind: input, shape index: {}]
  %s3 = inlined_call_operand.hbm [shape: f32[128,128], index: 3, kind: output, shape index: {}]
  %s4 = sld [smem:[#allocation0]]
  $region22: #{tpu_custom_call.1} parent=0
    _
  %s6 = ssub.s32 1, %s4
  %s7 = scalar_select 0, %s6, %s4
  $region1: #{tpu_custom_call.1} parent=0
    #allocation2 [shape = 'u8[65536]{0}', space=vmem, size = 0x10000, scoped, tag = 'output window, operand 0, single buffered']
    #allocation3 [shape = 's32[1]{0}', space=sflag, size = 0x4, scoped, tag = 'scoped memory for tpu_custom_call.1']
    %8 = vsyncpa [#allocation3], 0
    // Predicated region
    $region2: #{tpu_custom_call.1} parent=1 // pred_check
      _
    $region3: #{tpu_custom_call.1} parent=1 // pred_check_branch
      %10 = sbr.rel (0) target = $region5
    $region4: #{tpu_custom_call.1} parent=1 // pred_region
      _
    $region5: #{tpu_custom_call.1} parent=1 // pred_fallthru
      _
    // Predicated region
    $region6: #{tpu_custom_call.1} parent=1 // pred_check
      _
    $region7: #{tpu_custom_call.1} parent=1 // pred_check_branch
      %12 = sbr.rel (0) target = $region9
    $region8: #{tpu_custom_call.1} parent=1 // pred_region
      _
    $region9: #{tpu_custom_call.1} parent=1 // pred_fallthru
      _
    // Predicated region
    $region10: #{tpu_custom_call.1} parent=1 // pred_check
      _
    $region11: #{tpu_custom_call.1} parent=1 // pred_check_branch
      %14 = sbr.rel (0) target = $region13
    $region12: #{tpu_custom_call.1} parent=1 // pred_region
      _
    $region13: #{tpu_custom_call.1} parent=1 // pred_fallthru
      _
    %v15 = vld [vmem:[%s0] sm:$0xff]
    %v16 = vld [vmem:[%s0 + $0x8] sm:$0xff]
    %v17 = vld [vmem:[%s0 + $0x10] sm:$0xff]
    %v18 = vld [vmem:[%s0 + $0x18] sm:$0xff]
    %v19 = vld [vmem:[%s0 + $0x20] sm:$0xff]
    %v20 = vld [vmem:[%s0 + $0x28] sm:$0xff]
    %v21 = vld [vmem:[%s0 + $0x30] sm:$0xff]
    %v22 = vld [vmem:[%s0 + $0x38] sm:$0xff]
    %v23 = vld [vmem:[%s0 + $0x40] sm:$0xff]
    %v24 = vld [vmem:[%s0 + $0x48] sm:$0xff]
    %v25 = vld [vmem:[%s0 + $0x50] sm:$0xff]
    %v26 = vld [vmem:[%s0 + $0x58] sm:$0xff]
    %v27 = vld [vmem:[%s0 + $0x60] sm:$0xff]
    %v28 = vld [vmem:[%s0 + $0x68] sm:$0xff]
    %v29 = vld [vmem:[%s0 + $0x70] sm:$0xff]
    %v30 = vld [vmem:[%s0 + $0x78] sm:$0xff]
    %v31 = vld [vmem:[%s1] sm:$0xff]
    %v32 = vld [vmem:[%s1 + $0x8] sm:$0xff]
    %v33 = vld [vmem:[%s1 + $0x10] sm:$0xff]
    %v34 = vld [vmem:[%s1 + $0x18] sm:$0xff]
    %v35 = vld [vmem:[%s1 + $0x20] sm:$0xf]
    %v36 = vld [vmem:[%s2] sm:$0x1]
    %v38 = vlaneseq
    %v39 = vshrl.u32 %v38, 7
    %v40 = vsub.s32 0, %v39
    %v41 = vrot.slane %v36, %v40
    %vm43 = vcmask 293888
    %v45 = vsel %vm43, %v15, 0
    %v48 = vsel %vm43, %v16, 0
    %v51 = vsel %vm43, %v17, 0
    %v54 = vsel %vm43, %v18, 0
    %v57 = vsel %vm43, %v19, 0
    %v60 = vsel %vm43, %v20, 0
    %v63 = vsel %vm43, %v21, 0
    %v66 = vsel %vm43, %v22, 0
    %v69 = vsel %vm43, %v23, 0
    %v72 = vsel %vm43, %v24, 0
    %v75 = vsel %vm43, %v25, 0
    %v78 = vsel %vm43, %v26, 0
    %v81 = vsel %vm43, %v27, 0
    %v84 = vsel %vm43, %v28, 0
    %v87 = vsel %vm43, %v29, 0
    %v90 = vsel %vm43, %v30, 0
    %vm92 = vcmask 1043456
    %v94 = vsel %vm92, %v35, 0
    %96 = vmatprep.subr.mxu0 0.0
    %97 = vmatpush1.msra.mxu0 %v31
    %98 = vmatprep.subr.mxu0 0.0
    %99 = vmatpush1.msra.mxu0 %v32
    %100 = vmatprep.subr.mxu0 0.0
    %101 = vmatpush1.msra.mxu0 %v33
    %102 = vmatprep.subr.mxu0 0.0
    %103 = vmatpush1.msra.mxu0 %v34
    %104 = vmatprep.subr.mxu0 0.0
    %105 = vmatpush1.msra.mxu0 %v94
    %106 = vmatprep.subr.mxu0 0.0
    %107 = vmatpush1.msra.mxu0 0.0
    %108 = vmatprep.subr.mxu0 0.0
    %109 = vmatpush1.msra.mxu0 0.0
    %110 = vmatprep.subr.mxu0 0.0
    %111 = vmatpush1.msra.mxu0 0.0
    %112 = vmatprep.subr.mxu0 0.0
    %113 = vmatpush1.msra.mxu0 0.0
    %114 = vmatprep.subr.mxu0 0.0
    %115 = vmatpush1.msra.mxu0 0.0
    %116 = vmatprep.subr.mxu0 0.0
    %117 = vmatpush1.msra.mxu0 0.0
    %118 = vmatprep.subr.mxu0 0.0
    %119 = vmatpush1.msra.mxu0 0.0
    %120 = vmatprep.subr.mxu0 0.0
    %121 = vmatpush1.msra.mxu0 0.0
    %122 = vmatprep.subr.mxu0 0.0
    %123 = vmatpush1.msra.mxu0 0.0
    %124 = vmatprep.subr.mxu0 0.0
    %125 = vmatpush1.msra.mxu0 0.0
    %126 = vmatprep.subr.mxu0 0.0
    %127 = vmatpush1.msra.mxu0 0.0
    %128 = vmatprep.subr.mxu0 0.0
    %129 = vmatpush1.msra.mxu0 0.0
    %130 = vmatprep.subr.mxu0 0.0
    %131 = vmatpush1.msra.mxu0 0.0
    %132 = vmatprep.subr.mxu0 0.0
    %133 = vmatpush1.msra.mxu0 0.0
    %134 = vmatprep.subr.mxu0 0.0
    %135 = vmatpush1.msra.mxu0 0.0
    %136 = vmatprep.subr.mxu0 0.0
    %137 = vmatpush1.msra.mxu0 0.0
    %138 = vmatprep.subr.mxu0 0.0
    %139 = vmatpush1.msra.mxu0 0.0
    %140 = vmatprep.subr.mxu0 0.0
    %141 = vmatpush1.msra.mxu0 0.0
    %142 = vmatprep.subr.mxu0 0.0
    %143 = vmatpush1.msra.mxu0 0.0
    %144 = vmatprep.subr.mxu0 0.0
    %145 = vmatpush1.msra.mxu0 0.0
    %146 = vmatprep.subr.mxu0 0.0
    %147 = vmatpush1.msra.mxu0 0.0
    %148 = vmatprep.subr.mxu0 0.0
    %149 = vmatpush1.msra.mxu0 0.0
    %150 = vmatprep.subr.mxu0 0.0
    %151 = vmatpush1.msra.mxu0 0.0
    %152 = vmatprep.subr.mxu0 0.0
    %153 = vmatpush1.msra.mxu0 0.0
    %154 = vmatprep.subr.mxu0 0.0
    %155 = vmatpush1.msra.mxu0 0.0
    %156 = vmatprep.subr.mxu0 0.0
    %157 = vmatpush1.msra.mxu0 0.0
    %158 = vmatprep.subr.mxu0 0.0
    %159 = vmatpush1.msra.mxu0 0.0
    %160 = vmatprep.mubr.f32.mxu0 0.0
    %161 = vmatmul.mubr.f32.gmra.mrb[0].mxu0 %v45
    %v162 = vpop.f32.mrb[0].mxu0
    %v163 = vadd.f32 %v41, %v162
    %v164 = vpop.f32.mrb[0].mxu0
    %165 = vmatprep.mubr.f32.mxu0 0.0
    %166 = vmatmul.mubr.f32.gmra.mrb[0].mxu0 %v48
    %v167 = vpop.f32.mrb[0].mxu0
    %v168 = vadd.f32 %v41, %v167
    %v169 = vpop.f32.mrb[0].mxu0
    %170 = vmatprep.mubr.f32.mxu0 0.0
    %171 = vmatmul.mubr.f32.gmra.mrb[0].mxu0 %v51
    %v172 = vpop.f32.mrb[0].mxu0
    %v173 = vadd.f32 %v41, %v172
    %v174 = vpop.f32.mrb[0].mxu0
    %175 = vmatprep.mubr.f32.mxu0 0.0
    %176 = vmatmul.mubr.f32.gmra.mrb[0].mxu0 %v54
    %v177 = vpop.f32.mrb[0].mxu0
    %v178 = vadd.f32 %v41, %v177
    %v179 = vpop.f32.mrb[0].mxu0
    %180 = vmatprep.mubr.f32.mxu0 0.0
    %181 = vmatmul.mubr.f32.gmra.mrb[0].mxu0 %v57
    %v182 = vpop.f32.mrb[0].mxu0
    %v183 = vadd.f32 %v41, %v182
    %v184 = vpop.f32.mrb[0].mxu0
    %185 = vmatprep.mubr.f32.mxu0 0.0
    %186 = vmatmul.mubr.f32.gmra.mrb[0].mxu0 %v60
    %v187 = vpop.f32.mrb[0].mxu0
    %v188 = vadd.f32 %v41, %v187
    %v189 = vpop.f32.mrb[0].mxu0
    %190 = vmatprep.mubr.f32.mxu0 0.0
    %191 = vmatmul.mubr.f32.gmra.mrb[0].mxu0 %v63
    %v192 = vpop.f32.mrb[0].mxu0
    %v193 = vadd.f32 %v41, %v192
    %v194 = vpop.f32.mrb[0].mxu0
    %195 = vmatprep.mubr.f32.mxu0 0.0
    %196 = vmatmul.mubr.f32.gmra.mrb[0].mxu0 %v66
    %v197 = vpop.f32.mrb[0].mxu0
    %v198 = vadd.f32 %v41, %v197
    %v199 = vpop.f32.mrb[0].mxu0
    %200 = vmatprep.mubr.f32.mxu0 0.0
    %201 = vmatmul.mubr.f32.gmra.mrb[0].mxu0 %v69
    %v202 = vpop.f32.mrb[0].mxu0
    %v203 = vadd.f32 %v41, %v202
    %v204 = vpop.f32.mrb[0].mxu0
    %205 = vmatprep.mubr.f32.mxu0 0.0
    %206 = vmatmul.mubr.f32.gmra.mrb[0].mxu0 %v72
    %v207 = vpop.f32.mrb[0].mxu0
    %v208 = vadd.f32 %v41, %v207
    %v209 = vpop.f32.mrb[0].mxu0
    %210 = vmatprep.mubr.f32.mxu0 0.0
    %211 = vmatmul.mubr.f32.gmra.mrb[0].mxu0 %v75
    %v212 = vpop.f32.mrb[0].mxu0
    %v213 = vadd.f32 %v41, %v212
    %v214 = vpop.f32.mrb[0].mxu0
    %215 = vmatprep.mubr.f32.mxu0 0.0
    %216 = vmatmul.mubr.f32.gmra.mrb[0].mxu0 %v78
    %v217 = vpop.f32.mrb[0].mxu0
    %v218 = vadd.f32 %v41, %v217
    %v219 = vpop.f32.mrb[0].mxu0
    %220 = vmatprep.mubr.f32.mxu0 0.0
    %221 = vmatmul.mubr.f32.gmra.mrb[0].mxu0 %v81
    %v222 = vpop.f32.mrb[0].mxu0
    %v223 = vadd.f32 %v41, %v222
    %v224 = vpop.f32.mrb[0].mxu0
    %225 = vmatprep.mubr.f32.mxu0 0.0
    %226 = vmatmul.mubr.f32.gmra.mrb[0].mxu0 %v84
    %v227 = vpop.f32.mrb[0].mxu0
    %v228 = vadd.f32 %v41, %v227
    %v229 = vpop.f32.mrb[0].mxu0
    %230 = vmatprep.mubr.f32.mxu0 0.0
    %231 = vmatmul.mubr.f32.gmra.mrb[0].mxu0 %v87
    %v232 = vpop.f32.mrb[0].mxu0
    %v233 = vadd.f32 %v41, %v232
    %v234 = vpop.f32.mrb[0].mxu0
    %235 = vmatprep.mubr.f32.mxu0 0.0
    %236 = vmatmul.mubr.f32.gmra.mrb[0].mxu0 %v90
    %v237 = vpop.f32.mrb[0].mxu0
    %v238 = vadd.f32 %v41, %v237
    %v239 = vpop.f32.mrb[0].mxu0
    %240 = vdwg.mxu0
    %v241 = vmax.f32 %v163, 0.0
    %v242 = vmax.f32 %v168, 0.0
    %v243 = vmax.f32 %v173, 0.0
    %v244 = vmax.f32 %v178, 0.0
    %v245 = vmax.f32 %v183, 0.0
    %v246 = vmax.f32 %v188, 0.0
    %v247 = vmax.f32 %v193, 0.0
    %v248 = vmax.f32 %v198, 0.0
    %v249 = vmax.f32 %v203, 0.0
    %v250 = vmax.f32 %v208, 0.0
    %v251 = vmax.f32 %v213, 0.0
    %v252 = vmax.f32 %v218, 0.0
    %v253 = vmax.f32 %v223, 0.0
    %v254 = vmax.f32 %v228, 0.0
    %v255 = vmax.f32 %v233, 0.0
    %v256 = vmax.f32 %v238, 0.0
    %257 = vst [vmem:[#allocation2] sm:$0xff] %v241
    %258 = vst [vmem:[#allocation2 + $0x8] sm:$0xff] %v242
    %259 = vst [vmem:[#allocation2 + $0x10] sm:$0xff] %v243
    %260 = vst [vmem:[#allocation2 + $0x18] sm:$0xff] %v244
    %261 = vst [vmem:[#allocation2 + $0x20] sm:$0xff] %v245
    %262 = vst [vmem:[#allocation2 + $0x28] sm:$0xff] %v246
    %263 = vst [vmem:[#allocation2 + $0x30] sm:$0xff] %v247
    %264 = vst [vmem:[#allocation2 + $0x38] sm:$0xff] %v248
    %265 = vst [vmem:[#allocation2 + $0x40] sm:$0xff] %v249
    %266 = vst [vmem:[#allocation2 + $0x48] sm:$0xff] %v250
    %267 = vst [vmem:[#allocation2 + $0x50] sm:$0xff] %v251
    %268 = vst [vmem:[#allocation2 + $0x58] sm:$0xff] %v252
    %269 = vst [vmem:[#allocation2 + $0x60] sm:$0xff] %v253
    %270 = vst [vmem:[#allocation2 + $0x68] sm:$0xff] %v254
    %271 = vst [vmem:[#allocation2 + $0x70] sm:$0xff] %v255
    %272 = vst [vmem:[#allocation2 + $0x78] sm:$0xff] %v256
    // Predicated region
    $region14: #{tpu_custom_call.1} parent=1 // pred_check
      _
    $region15: #{tpu_custom_call.1} parent=1 // pred_check_branch
      %274 = sbr.rel (0) target = $region17
    $region16: #{tpu_custom_call.1} parent=1 // pred_region
      %s276 = ssub.s32 2048, 2048
      %277 = vsyncadd [#allocation3], %s276
      %s278 = sshll.u32 [#allocation2], 4
      %s279 = int_to_ptr.vmem [resolvable:$true] %s278
      %284 = dma.vmem_to_hbm [thread:$0]  %s279, 2048, %s3, [#allocation3], 128, 128, 8
    $region17: #{tpu_custom_call.1} parent=1 // pred_fallthru
      _
    // Predicated region
    $region18: #{tpu_custom_call.1} parent=1 // pred_check
      _
    $region19: #{tpu_custom_call.1} parent=1 // pred_check_branch
      %286 = sbr.rel (0) target = $region21
    $region20: #{tpu_custom_call.1} parent=1 // pred_region
      %287 = dma.done [#allocation3], 2048
    $region21: #{tpu_custom_call.1} parent=1 // pred_fallthru
      _
    %288 = vsyncpa [#allocation3], 1

</llo_original>
